<compile_context>
chip_gen: v5e
topology: v5e:2x2
jax: 0.10.0
libtpu: 0.0.40
codegen_flags: <defaults>
</compile_context>

<pallas_src>
import functools

import jax
import jax.numpy as jnp
from jax.experimental import pallas as pl
from jax.experimental.pallas import tpu as pltpu

LANES = 128
SUBLANES = 8


def _round_up(x, m):
    return ((x + m - 1) // m) * m


def _num_tensorcores():
    """Best-effort TensorCore count of the local device (perf-only heuristic)."""
    try:
        dev = jax.devices()[0]
    except Exception:
        return 1
    nc = getattr(dev, "num_cores", None)
    if isinstance(nc, int) and nc > 0:
        return nc
    kind = str(getattr(dev, "device_kind", "")).lower()
    return 2 if ("v7" in kind or "7x" in kind) else 1


def _pow(x, gamma):
    """x ** gamma with cheap VPU paths for common static gammas."""
    g = float(gamma)
    if g == 0.0:
        return jnp.ones_like(x)
    if g == 1.0:
        return x
    if g == int(g) and 2 <= int(g) <= 8:
        # repeated multiply (binary exponentiation) -> stays on the VALU
        n = int(g)
        base, result = x, None
        while n:
            if n & 1:
                result = base if result is None else result * base
            n >>= 1
            if n:
                base = base * base
        return result
    if g == 0.5:
        return jnp.sqrt(x)
    return x ** g


def _pow_transcendentals(gamma):
    g = float(gamma)
    if g in (0.0, 1.0) or (g == int(g) and 0 <= int(g) <= 8):
        return 0
    if g == 0.5:
        return 2
    return 4  # pow -> exp(g * log(x))


def _focal_loss_kernel(n_ref, p0_ref, p1_ref, lab_ref, out_ref, acc_ref, *,
                       gamma, blk):
    # n_ref:   (1,) int32 SMEM scalar-prefetch (true element count)
    # p0/p1/lab: (blk, 128) VMEM tiles
    # out_ref: (1, 1) SMEM partial sum for this split
    # acc_ref: (8, 128) f32 VMEM accumulator, persists across the reduction axis
    s = pl.program_id(0)
    t = pl.program_id(1)
    inner = pl.num_programs(1)

    @pl.when(t == 0)
    def _init():
        acc_ref[...] = jnp.zeros_like(acc_ref)

    p0 = p0_ref[...].astype(jnp.float32)
    p1 = p1_ref[...].astype(jnp.float32)
    lab = lab_ref[...].astype(jnp.float32)

    eps = jnp.float32(1e-6)
    loss = (-_pow(p0, gamma) * lab * jnp.log(p1 + eps)
            - _pow(p1, gamma) * (1.0 - lab) * jnp.log(p0 + eps))

    def _fold8(x):
        # (blk, 128) -> (8, 128): layout-preserving reshape + vreg-wise adds (VPU)
        return x.reshape(-1, SUBLANES, LANES).sum(axis=0)

    n = n_ref[0]
    row0 = (s * inner + t) * blk
    needs_mask = (row0 + blk) * LANES > n

    @pl.when(jnp.logical_not(needs_mask))
    def _full_block():
        acc_ref[...] += _fold8(loss)

    @pl.when(needs_mask)
    def _tail_block():
        # jnp.where is a select, so garbage (even NaN) in out-of-range rows is dropped.
        row_ids = jax.lax.broadcasted_iota(jnp.int32, (blk, LANES), 0)
        lane_ids = jax.lax.broadcasted_iota(jnp.int32, (blk, LANES), 1)
        flat = (row0 + row_ids) * LANES + lane_ids
        acc_ref[...] += _fold8(jnp.where(flat < n, loss, jnp.float32(0.0)))

    @pl.when(t == inner - 1)
    def _finalize():
        out_ref[0, 0] = jnp.sum(acc_ref[...])


@functools.partial(jax.jit, static_argnames=("gamma", "block_rows"))
def focal_loss(probs, labels, gamma=1.0, block_rows=2048):
    """probs: (N, 2), labels: (N,) -> scalar float32 mean focal loss."""
    n = probs.shape[0]
    assert probs.shape[1] == 2, "FocalLoss expects 2 class-probability columns"

    # ---- lane-dense tiling of the flat N axis --------------------------------
    # Pad only to a full (8, 128) row group (<= 1023 elems); real masking is in-kernel.
    rows = _round_up(pl.cdiv(n, LANES), SUBLANES)
    padded_n = rows * LANES

    # TODO(synk): if the producer can emit probs as (2, N) (or two (N,) vectors),
    # these column slices become free views and the relayout copy disappears.
    p0 = probs[:, 0]
    p1 = probs[:, 1]
    lab = labels.reshape(n)
    if padded_n != n:
        pad = padded_n - n
        p0 = jnp.pad(p0, (0, pad))
        p1 = jnp.pad(p1, (0, pad))
        lab = jnp.pad(lab, (0, pad))
    p0 = p0.reshape(rows, LANES)
    p1 = p1.reshape(rows, LANES)
    lab = lab.reshape(rows, LANES)

    blk = min(_round_up(int(block_rows), SUBLANES), rows)
    num_blocks = pl.cdiv(rows, blk)
    # Use the 2-way "parallel" split only on multi-TensorCore parts and only when the
    # blocks split evenly (avoids phantom fully-OOB blocks and a redundant finalize).
    num_splits = 2 if (_num_tensorcores() >= 2
                       and num_blocks >= 2
                       and num_blocks % 2 == 0) else 1
    inner = num_blocks // num_splits
    grid = (num_splits, inner)

    def _in_map(s, t, n_ref):
        return (s * inner + t, 0)

    in_spec = pl.BlockSpec((blk, LANES), _in_map)

    kernel = functools.partial(_focal_loss_kernel, gamma=float(gamma), blk=blk)

    bytes_in = (p0.size * p0.dtype.itemsize
                + p1.size * p1.dtype.itemsize
                + lab.size * lab.dtype.itemsize)
    trans_per_elem = 2 + _pow_transcendentals(gamma)

    n_arr = jnp.array([n], dtype=jnp.int32)

    partials = pl.pallas_call(
        kernel,
        out_shape=jax.ShapeDtypeStruct((num_splits, 1), jnp.float32),
        grid_spec=pltpu.PrefetchScalarGridSpec(
            num_scalar_prefetch=1,
            grid=grid,
            in_specs=[in_spec, in_spec, in_spec],
            out_specs=pl.BlockSpec((1, 1), lambda s, t, n_ref: (s, 0),
                                   memory_space=pltpu.SMEM),
            scratch_shapes=[pltpu.VMEM((SUBLANES, LANES), jnp.float32)],
        ),
        compiler_params=pltpu.CompilerParams(
            dimension_semantics=("parallel", "arbitrary"),
        ),
        cost_estimate=pl.CostEstimate(
            flops=10 * padded_n,
            transcendentals=trans_per_elem * padded_n,
            bytes_accessed=bytes_in + num_splits * 4,
        ),
    )(n_arr, p0, p1, lab)

    # Combine per-split partial sums; mean over the *real* N.
    return jnp.sum(partials) / jnp.float32(n)


def focal_loss_ref(probs, labels, gamma=1.0):
    p0 = probs[:, 0]
    p1 = probs[:, 1]
    loss = (-(p0 ** gamma) * labels * jnp.log(p1 + 1e-6)
            + -(p1 ** gamma) * (1.0 - labels) * jnp.log(p0 + 1e-6))
    return jnp.mean(loss)


if __name__ == "__main__":
    key = jax.random.PRNGKey(0)
    k_logits, k_labels = jax.random.split(key)

    N = 512  # flat batch size (small, deterministic)
    logits = jax.random.normal(k_logits, (N, 2), dtype=jnp.float32)
    probs = jax.nn.softmax(logits, axis=1)                       # (N, 2)
    labels = jax.random.bernoulli(k_labels, 0.5, (N,)).astype(jnp.float32)

    out = focal_loss(probs, labels, gamma=1.0)
    out = jax.block_until_ready(out)

    ref = focal_loss_ref(probs, labels, gamma=1.0)
    assert jnp.isfinite(out), "kernel produced non-finite loss"
    assert jnp.allclose(out, ref, rtol=1e-5, atol=1e-5), (out, ref)

    print("KERNEL_OK")
</pallas_src>

<mosaic_0001>
module attributes {stable_mosaic.version = 11 : i64} {
  func.func @_focal_loss_kernel(%arg0: i32, %arg1: i32, %arg2: memref<1xi32, #tpu.memory_space<smem>>, %arg3: memref<8x128xf32, #tpu.memory_space<vmem>>, %arg4: memref<8x128xf32, #tpu.memory_space<vmem>>, %arg5: memref<8x128xf32, #tpu.memory_space<vmem>>, %arg6: memref<1x1xf32, #tpu.memory_space<smem>>, %arg7: memref<8x128xf32, #tpu.memory_space<vmem>>) attributes {dimension_semantics = [#tpu.dimension_semantics<parallel>, #tpu.dimension_semantics<arbitrary>], iteration_bounds = array<i64: 1, 1>, scalar_prefetch = 1 : i64, scratch_operands = 1 : i64, tpu.core_type = #tpu.core_type<tc>, window_params = [{transform_indices = @transform_0, window_bounds = array<i64: 8, 128>}, {transform_indices = @transform_1, window_bounds = array<i64: 8, 128>}, {transform_indices = @transform_2, window_bounds = array<i64: 8, 128>}, {transform_indices = @transform_3, window_bounds = array<i64: 1, 1>}]} {
    %c0_i32 = arith.constant 0 : i32
    %0 = arith.cmpi eq, %arg1, %c0_i32 : i32
    %1 = arith.extui %0 : i1 to i32
    %c0_i32_0 = arith.constant 0 : i32
    %2 = arith.cmpi ne, %1, %c0_i32_0 : i32
    scf.if %2 {
      %cst_15 = arith.constant 0.000000e+00 : f32
      %36 = vector.broadcast %cst_15 : f32 to vector<8x128xf32>
      %c0_16 = arith.constant 0 : index
      %c0_17 = arith.constant 0 : index
      %37 = vector.load %arg7[%c0_16, %c0_17] : memref<8x128xf32, #tpu.memory_space<vmem>>, vector<8x128xf32>
      tpu.vector_store %arg7[%c0_16, %c0_17], %36 {strides = array<i32>} : memref<8x128xf32, #tpu.memory_space<vmem>>, vector<8x128xf32>,
    } else {
    }
    %c0 = arith.constant 0 : index
    %c0_1 = arith.constant 0 : index
    %3 = vector.load %arg3[%c0, %c0_1] : memref<8x128xf32, #tpu.memory_space<vmem>>, vector<8x128xf32>
    %c0_2 = arith.constant 0 : index
    %c0_3 = arith.constant 0 : index
    %4 = vector.load %arg4[%c0_2, %c0_3] : memref<8x128xf32, #tpu.memory_space<vmem>>, vector<8x128xf32>
    %c0_4 = arith.constant 0 : index
    %c0_5 = arith.constant 0 : index
    %5 = vector.load %arg5[%c0_4, %c0_5] : memref<8x128xf32, #tpu.memory_space<vmem>>, vector<8x128xf32>
    %cst = arith.constant 0.000000e+00 : f32
    %6 = vector.broadcast %cst : f32 to vector<8x128xf32>
    %7 = arith.subf %6, %3 : vector<8x128xf32>
    %8 = arith.mulf %7, %5 : vector<8x128xf32>
    %cst_6 = arith.constant 9.99999997E-7 : f32
    %9 = vector.broadcast %cst_6 : f32 to vector<8x128xf32>
    %10 = arith.addf %4, %9 : vector<8x128xf32>
    %11 = math.log %10 : vector<8x128xf32>
    %12 = arith.mulf %8, %11 : vector<8x128xf32>
    %cst_7 = arith.constant 1.000000e+00 : f32
    %13 = vector.broadcast %cst_7 : f32 to vector<8x128xf32>
    %14 = arith.subf %13, %5 : vector<8x128xf32>
    %15 = arith.mulf %4, %14 : vector<8x128xf32>
    %cst_8 = arith.constant 9.99999997E-7 : f32
    %16 = vector.broadcast %cst_8 : f32 to vector<8x128xf32>
    %17 = arith.addf %3, %16 : vector<8x128xf32>
    %18 = math.log %17 : vector<8x128xf32>
    %19 = arith.mulf %15, %18 : vector<8x128xf32>
    %20 = arith.subf %12, %19 : vector<8x128xf32>
    %c0_9 = arith.constant 0 : index
    %21 = memref.load %arg2[%c0_9] : memref<1xi32, #tpu.memory_space<smem>>
    %c1_i32 = arith.constant 1 : i32
    %22 = arith.muli %arg0, %c1_i32 : i32
    %23 = arith.addi %22, %arg1 : i32
    %c8_i32 = arith.constant 8 : i32
    %24 = arith.muli %23, %c8_i32 : i32
    %c8_i32_10 = arith.constant 8 : i32
    %25 = arith.addi %24, %c8_i32_10 : i32
    %c128_i32 = arith.constant 128 : i32
    %26 = arith.muli %25, %c128_i32 : i32
    %27 = arith.cmpi sgt, %26, %21 : i32
    %true = arith.constant true
    %28 = arith.xori %27, %true : i1
    %29 = arith.extui %28 : i1 to i32
    %c0_i32_11 = arith.constant 0 : i32
    %30 = arith.cmpi ne, %29, %c0_i32_11 : i32
    scf.if %30 {
      %c0_15 = arith.constant 0 : index
      %c0_16 = arith.constant 0 : index
      %36 = vector.load %arg7[%c0_15, %c0_16] : memref<8x128xf32, #tpu.memory_space<vmem>>, vector<8x128xf32>
      %37 = vector.shape_cast %20 : vector<8x128xf32> to vector<1x8x128xf32>
      %cst_17 = arith.constant dense<0.000000e+00> : vector<8x128xf32>
      %38 = vector.multi_reduction <add>, %37, %cst_17 [0] : vector<1x8x128xf32> to vector<8x128xf32>
      %39 = arith.addf %36, %38 : vector<8x128xf32>
      %c0_18 = arith.constant 0 : index
      %c0_19 = arith.constant 0 : index
      %40 = vector.load %arg7[%c0_18, %c0_19] : memref<8x128xf32, #tpu.memory_space<vmem>>, vector<8x128xf32>
      tpu.vector_store %arg7[%c0_18, %c0_19], %39 {strides = array<i32>} : memref<8x128xf32, #tpu.memory_space<vmem>>, vector<8x128xf32>,
    } else {
    }
    %31 = arith.extui %27 : i1 to i32
    %c0_i32_12 = arith.constant 0 : i32
    %32 = arith.cmpi ne, %31, %c0_i32_12 : i32
    scf.if %32 {
      %36 = tpu.iota {dimensions = array<i32: 0>} : vector<8x128xi32>
      %37 = tpu.iota {dimensions = array<i32: 1>} : vector<8x128xi32>
      %38 = vector.broadcast %24 : i32 to vector<8x128xi32>
      %39 = arith.addi %38, %36 : vector<8x128xi32>
      %c128_i32_15 = arith.constant 128 : i32
      %40 = vector.broadcast %c128_i32_15 : i32 to vector<8x128xi32>
      %41 = arith.muli %39, %40 : vector<8x128xi32>
      %42 = arith.addi %41, %37 : vector<8x128xi32>
      %c0_16 = arith.constant 0 : index
      %c0_17 = arith.constant 0 : index
      %43 = vector.load %arg7[%c0_16, %c0_17] : memref<8x128xf32, #tpu.memory_space<vmem>>, vector<8x128xf32>
      %44 = vector.broadcast %21 : i32 to vector<8x128xi32>
      %45 = arith.cmpi slt, %42, %44 : vector<8x128xi32>
      %cst_18 = arith.constant 0.000000e+00 : f32
      %46 = vector.broadcast %cst_18 : f32 to vector<8x128xf32>
      %47 = arith.select %45, %20, %46 : vector<8x128xi1>, vector<8x128xf32>
      %48 = vector.shape_cast %47 : vector<8x128xf32> to vector<1x8x128xf32>
      %cst_19 = arith.constant dense<0.000000e+00> : vector<8x128xf32>
      %49 = vector.multi_reduction <add>, %48, %cst_19 [0] : vector<1x8x128xf32> to vector<8x128xf32>
      %50 = arith.addf %43, %49 : vector<8x128xf32>
      %c0_20 = arith.constant 0 : index
      %c0_21 = arith.constant 0 : index
      %51 = vector.load %arg7[%c0_20, %c0_21] : memref<8x128xf32, #tpu.memory_space<vmem>>, vector<8x128xf32>
      tpu.vector_store %arg7[%c0_20, %c0_21], %50 {strides = array<i32>} : memref<8x128xf32, #tpu.memory_space<vmem>>, vector<8x128xf32>,
    } else {
    }
    %c0_i32_13 = arith.constant 0 : i32
    %33 = arith.cmpi eq, %arg1, %c0_i32_13 : i32
    %34 = arith.extui %33 : i1 to i32
    %c0_i32_14 = arith.constant 0 : i32
    %35 = arith.cmpi ne, %34, %c0_i32_14 : i32
    scf.if %35 {
      %c0_15 = arith.constant 0 : index
      %c0_16 = arith.constant 0 : index
      %36 = vector.load %arg7[%c0_15, %c0_16] : memref<8x128xf32, #tpu.memory_space<vmem>>, vector<8x128xf32>
      %37 = vector.shape_cast %36 : vector<8x128xf32> to vector<1x8x128xf32>
      %cst_17 = arith.constant dense<0.000000e+00> : vector<1xf32>
      %38 = vector.multi_reduction <add>, %37, %cst_17 [1, 2] : vector<1x8x128xf32> to vector<1xf32>
      %39 = vector.shape_cast %38 : vector<1xf32> to vector<1x1x1xf32>
      %40 = vector.extract %39[0, 0, 0] : f32 from vector<1x1x1xf32>
      %c0_18 = arith.constant 0 : index
      %c0_19 = arith.constant 0 : index
      %41 = memref.load %arg6[%c0_18, %c0_19] : memref<1x1xf32, #tpu.memory_space<smem>>
      memref.store %40, %arg6[%c0_18, %c0_19] : memref<1x1xf32, #tpu.memory_space<smem>>
    } else {
    }
    return
  }
  func.func @transform_0(%arg0: i32, %arg1: i32, %arg2: memref<1xi32, #tpu.memory_space<smem>>) -> (i32, i32) {
    %c1_i32 = arith.constant 1 : i32
    %0 = arith.muli %arg0, %c1_i32 : i32
    %1 = arith.addi %0, %arg1 : i32
    %c0_i32 = arith.constant 0 : i32
    %c0_i32_0 = arith.constant 0 : i32
    return %1, %c0_i32 : i32, i32
  }
  func.func @transform_1(%arg0: i32, %arg1: i32, %arg2: memref<1xi32, #tpu.memory_space<smem>>) -> (i32, i32) {
    %c1_i32 = arith.constant 1 : i32
    %0 = arith.muli %arg0, %c1_i32 : i32
    %1 = arith.addi %0, %arg1 : i32
    %c0_i32 = arith.constant 0 : i32
    %c0_i32_0 = arith.constant 0 : i32
    return %1, %c0_i32 : i32, i32
  }
  func.func @transform_2(%arg0: i32, %arg1: i32, %arg2: memref<1xi32, #tpu.memory_space<smem>>) -> (i32, i32) {
    %c1_i32 = arith.constant 1 : i32
    %0 = arith.muli %arg0, %c1_i32 : i32
    %1 = arith.addi %0, %arg1 : i32
    %c0_i32 = arith.constant 0 : i32
    %c0_i32_0 = arith.constant 0 : i32
    return %1, %c0_i32 : i32, i32
  }
  func.func @transform_3(%arg0: i32, %arg1: i32, %arg2: memref<1xi32, #tpu.memory_space<smem>>) -> (i32, i32) {
    %c0_i32 = arith.constant 0 : i32
    %c0_i32_0 = arith.constant 0 : i32
    return %arg0, %c0_i32 : i32, i32
  }
}

</mosaic_0001>

<llo_original>
// kernel: focal_loss.1
$region0: #{focal_loss.1}
  #allocation0 [shape = 'u32[]', space=smem, size = 0x4, offset = 0x4, fixed_abs, tag = 'smem constant byte address 0x4 - core index']
  #allocation1 [shape = 'u32[72,128]{1,0:T(1,128)}', space=vmem, size = 0x9000, scoped, tag = 'internal scratch']
  #allocation2 [shape = 'f32[8,128]{1,0:T(8,128)}', space=vmem, size = 0x1000, scoped, tag = 'scratch operand']
  #allocation3 [shape = 's32[1]{0}', space=sflag, size = 0x4, scoped, tag = 'scoped memory for focal_loss.1']
  #allocation4 [shape = 's32[1]{0:T(128)S(6)}', space=smem, size = 0x200, scoped, tag = 'prefetched SMEM operand 0']
  %s0 = inlined_call_operand.<no memory space> [shape: s32[1], index: 0, kind: input, shape index: {}]
  %s1 = inlined_call_operand.vmem [shape: f32[8,128], index: 1, kind: input, shape index: {}]
  %s2 = inlined_call_operand.vmem [shape: f32[8,128], index: 2, kind: input, shape index: {}]
  %s3 = inlined_call_operand.vmem [shape: f32[8,128], index: 3, kind: input, shape index: {}]
  %s4 = inlined_call_operand.hbm [shape: f32[1,1], index: 4, kind: output, shape index: {}]
  %s5 = sld [smem:[#allocation0]]
  $region38: #{focal_loss.1} parent=0
    _
  %s7 = ssub.s32 1, %s5
  %s8 = scalar_select 0, %s7, %s5
  %9 = sst [smem:[#allocation4]] %s0
  $region1: #{focal_loss.1} parent=0
    #allocation5 [shape = 'u8[512]{0}', space=smem, size = 0x200, scoped, tag = 'output window, operand 0, single buffered']
    #allocation6 [shape = 's32[1]{0}', space=sflag, size = 0x4, scoped, tag = 'scoped memory for focal_loss.1']
    %10 = vsyncpa [#allocation6], 0
    // Predicated region
    $region2: #{focal_loss.1} parent=1 // pred_check
      _
    $region3: #{focal_loss.1} parent=1 // pred_check_branch
      %12 = sbr.rel (0) target = $region5
    $region4: #{focal_loss.1} parent=1 // pred_region
      %s13 = sadd.s32 0, 0
      %p14 = scmp.lt.s32.totalorder %s13, 0
      %s15 = scalar_select %p14, %s13, 0
      %s16 = smul.addr %s15, 8
      %s17 = scalar_lea.vmem %s1, %s16
      %s18 = sadd.s32 0, 0
    $region5: #{focal_loss.1} parent=1 // pred_fallthru
      _
    // Predicated region
    $region6: #{focal_loss.1} parent=1 // pred_check
      _
    $region7: #{focal_loss.1} parent=1 // pred_check_branch
      %20 = sbr.rel (0) target = $region9
    $region8: #{focal_loss.1} parent=1 // pred_region
      %s21 = sadd.s32 0, 0
      %p22 = scmp.lt.s32.totalorder %s21, 0
      %s23 = scalar_select %p22, %s21, 0
      %s24 = smul.addr %s23, 8
      %s25 = scalar_lea.vmem %s2, %s24
      %s26 = sadd.s32 0, 0
    $region9: #{focal_loss.1} parent=1 // pred_fallthru
      _
    // Predicated region
    $region10: #{focal_loss.1} parent=1 // pred_check
      _
    $region11: #{focal_loss.1} parent=1 // pred_check_branch
      %28 = sbr.rel (0) target = $region13
    $region12: #{focal_loss.1} parent=1 // pred_region
      %s29 = sadd.s32 0, 0
      %p30 = scmp.lt.s32.totalorder %s29, 0
      %s31 = scalar_select %p30, %s29, 0
      %s32 = smul.addr %s31, 8
      %s33 = scalar_lea.vmem %s3, %s32
      %s34 = sadd.s32 0, 0
    $region13: #{focal_loss.1} parent=1 // pred_fallthru
      _
    %s35 = sadd.s32 0, 0
    %p36 = scmp.lt.s32.totalorder %s35, 0
    %s37 = scalar_select %p36, %s35, 0
    %s38 = smul.addr %s37, 8
    %s39 = scalar_lea.vmem %s1, %s38
    %s40 = sadd.s32 0, 0
    %p41 = scmp.lt.s32.totalorder %s40, 0
    %s42 = scalar_select %p41, %s40, 0
    %s43 = smul.addr %s42, 8
    %s44 = scalar_lea.vmem %s2, %s43
    %s45 = sadd.s32 0, 0
    %p46 = scmp.lt.s32.totalorder %s45, 0
    %s47 = scalar_select %p46, %s45, 0
    %s48 = smul.addr %s47, 8
    %s49 = scalar_lea.vmem %s3, %s48
    %s50 = sadd.s32 0, 0
    %p51 = scmp.lt.s32.totalorder %s50, 0
    %s52 = scalar_select %p51, %s50, 0
    %s53 = smul.addr %s52, 8
    %s54 = scalar_lea.vmem %s1, %s53
    %s55 = sadd.s32 0, 0
    %s56 = sadd.s32 0, 0
    %p57 = scmp.lt.s32.totalorder %s56, 0
    %s58 = scalar_select %p57, %s56, 0
    %s59 = smul.addr %s58, 8
    %s60 = scalar_lea.vmem %s2, %s59
    %s61 = sadd.s32 0, 0
    %s62 = sadd.s32 0, 0
    %p63 = scmp.lt.s32.totalorder %s62, 0
    %s64 = scalar_select %p63, %s62, 0
    %s65 = smul.addr %s64, 8
    %s66 = scalar_lea.vmem %s3, %s65
    %s67 = sadd.s32 0, 0
    %p68 = scmp.eq.s32.totalorder 0, 0
    // Predicated region
    $region14: #{focal_loss.1} parent=1 // pred_check
      %p69 = pneg %p68
    $region15: #{focal_loss.1} parent=1 // pred_check_branch
      %71 = sbr.rel (%p69) target = $region17
    $region16: #{focal_loss.1} parent=1 // pred_region
      %72 = vst [vmem:[#allocation2] sm:$0xff] 0.0
    $region17: #{focal_loss.1} parent=1 // pred_fallthru
      _
    %v73 = vld [vmem:[%s54] sm:$0xff]
    %v74 = vld [vmem:[%s60] sm:$0xff]
    %v75 = vld [vmem:[%s66] sm:$0xff]
    %v76 = vsub.f32 0.0, %v73
    %v77 = vmul.f32 %v76, %v75
    %v78 = vadd.f32 %v74, 1e-06
    %v79 = vlog2.pop %v78
    %v80 = vmul.f32 %v79, 0.6931472
    %v81 = vmul.f32 %v77, %v80
    %v82 = vsub.f32 1.0, %v75
    %v83 = vmul.f32 %v74, %v82
    %v84 = vadd.f32 %v73, 1e-06
    %v85 = vlog2.pop %v84
    %v86 = vmul.f32 %v85, 0.6931472
    %v87 = vmul.f32 %v83, %v86
    %v88 = vsub.f32 %v81, %v87
    %s89 = sld [smem:[#allocation4]]
    %s90 = sadd.s32 0, 0
    %s91 = smul.u32 %s90, 8
    %s92 = sadd.s32 %s91, 8
    %s93 = smul.u32 %s92, 128
    %p94 = scmp.gt.s32.totalorder %s93, %s89
    %p95 = scmp.le.s32.totalorder %s93, %s89
    // Predicated region
    $region18: #{focal_loss.1} parent=1 // pred_check
      %p96 = pneg %p95
    $region19: #{focal_loss.1} parent=1 // pred_check_branch
      %98 = sbr.rel (%p96) target = $region21
    $region20: #{focal_loss.1} parent=1 // pred_region
      %v99 = vld [vmem:[#allocation2] sm:$0xff]
      %v100 = vadd.f32 %v88, 0.0
      %v101 = vadd.f32 %v99, %v100
      %102 = vst [vmem:[#allocation2] sm:$0xff] %v101
    $region21: #{focal_loss.1} parent=1 // pred_fallthru
      _
    // Predicated region
    $region22: #{focal_loss.1} parent=1 // pred_check
      %p103 = pneg %p94
    $region23: #{focal_loss.1} parent=1 // pred_check_branch
      %105 = sbr.rel (%p103) target = $region25
    $region24: #{focal_loss.1} parent=1 // pred_region
      %v106 = vlaneseq
      %v107 = vshrl.u32 %v106, 7
      %v108 = vlaneseq
      %v109 = vand.u32 %v108, 127
      %v110 = vstv %s91
      %v111 = vadd.s32 %v110, %v107
      %v112 = vmul.u32 %v111, 128
      %v113 = vadd.s32 %v112, %v109
      %v114 = vld [vmem:[#allocation2] sm:$0xff]
      %v115 = vstv %s89
      %vm116 = vcmp.lt.s32.totalorder %v113, %v115
      %v117 = vsel %vm116, %v88, 0.0
      %v118 = vadd.f32 %v117, 0.0
      %v119 = vadd.f32 %v114, %v118
      %120 = vst [vmem:[#allocation2] sm:$0xff] %v119
    $region25: #{focal_loss.1} parent=1 // pred_fallthru
      _
    // Predicated region
    $region26: #{focal_loss.1} parent=1 // pred_check
      %p121 = pneg %p68
    $region27: #{focal_loss.1} parent=1 // pred_check_branch
      %123 = sbr.rel (%p121) target = $region29
    $region28: #{focal_loss.1} parent=1 // pred_region
      %v124 = vld [vmem:[#allocation2] sm:$0xff]
      %125 = vadd.xlane.f32.xlu0 %v124
      %v126 = vpop.xlane.xlu0 %125
      %v127 = vrot.slane %v126, 4
      %v128 = vadd.f32 %v126, %v127
      %v129 = vrot.slane %v128, 2
      %v130 = vadd.f32 %v128, %v129
      %v131 = vrot.slane %v130, 1
      %v132 = vadd.f32 %v130, %v131
      %s133 = vtos %v132
      %s134 = scalar_lea.smem [#allocation5], 0
      %135 = sst [smem:[%s134]] %s133
    $region29: #{focal_loss.1} parent=1 // pred_fallthru
      _
    // Predicated region
    $region30: #{focal_loss.1} parent=1 // pred_check
      _
    $region31: #{focal_loss.1} parent=1 // pred_check_branch
      %137 = sbr.rel (0) target = $region33
    $region32: #{focal_loss.1} parent=1 // pred_region
      %139 = vsyncadd [#allocation6], 0
      %s141 = sshll.u32 %s4, 4
      %s142 = int_to_ptr.hbm [resolvable:$true] %s141
      %144 = dma.smem_to_hbm [#allocation5], 16, %s142, [#allocation6]
    $region33: #{focal_loss.1} parent=1 // pred_fallthru
      _
    // Predicated region
    $region34: #{focal_loss.1} parent=1 // pred_check
      _
    $region35: #{focal_loss.1} parent=1 // pred_check_branch
      %146 = sbr.rel (0) target = $region37
    $region36: #{focal_loss.1} parent=1 // pred_region
      %148 = dma.done [#allocation6], 16
    $region37: #{focal_loss.1} parent=1 // pred_fallthru
      _
    %149 = sfence
    %150 = vsyncpa [#allocation6], 1

</llo_original>
